<compile_context>
chip_gen: v5e
topology: v5e:2x2
jax: 0.10.0
libtpu: 0.0.40
codegen_flags: <defaults>
</compile_context>

<pallas_src>
import jax
import jax.numpy as jnp
from jax.experimental import pallas as pl
from jax.experimental.pallas import tpu as pltpu


def _round_up(x: int, m: int) -> int:
    return ((x + m - 1) // m) * m


def _mlp_kernel(x_ref, w1_ref, b1_ref, w2_ref, b2_ref, o_ref, acc_ref):
    """One (batch-tile, hid-chunk) grid step."""
    k = pl.program_id(1)

    @pl.when(k == 0)
    def _init():
        acc_ref[...] = jnp.zeros_like(acc_ref)

    # Cast x on the VPU (free filler under the MXU) instead of a wrapper pass.
    xk = x_ref[...].astype(w1_ref.dtype)
    # First layer, this hid chunk: (tb, tk) = (tb, inp) @ (inp, tk).
    h = jnp.dot(xk, w1_ref[...], preferred_element_type=jnp.float32)
    h = jnp.maximum(h + b1_ref[...], 0.0)                      # bias + ReLU (f32)
    # Second layer contribution of this hid chunk, accumulated in f32.
    acc_ref[...] += jnp.dot(h.astype(w2_ref.dtype), w2_ref[...],
                            preferred_element_type=jnp.float32)

    @pl.when(k == pl.num_programs(1) - 1)
    def _finalize():
        o_ref[...] = (acc_ref[...] + b2_ref[...]).astype(o_ref.dtype)


def double_layer_mlp(x, w1, b1, w2, b2, *, block_b=512, block_hid=512,
                     compute_dtype=jnp.bfloat16):
    """Forward pass of DoubleLayerMLP (PyTorch nn.Linear convention).

    x: (B, inp); w1: (hid, inp); b1: (hid,); w2: (out, hid); b2: (out,).
    Returns (B, out) in x.dtype.  Matmuls run in `compute_dtype` (bf16 default)
    with f32 accumulation; bias adds and ReLU are f32.
    """
    B, inp = x.shape
    hid, inp_w = w1.shape
    out, hid_w = w2.shape
    assert inp_w == inp and hid_w == hid and b1.shape == (hid,) and b2.shape == (out,)
    out_dtype = x.dtype

    LANE = 128
    w_bytes = jnp.dtype(compute_dtype).itemsize
    x_bytes = jnp.dtype(x.dtype).itemsize
    out_bytes = jnp.dtype(out_dtype).itemsize

    # Lane-dense padding of the feature dims that must be zero-padded.
    hid_p0 = _round_up(hid, LANE)
    out_p = _round_up(out, LANE)

    # ---- batch tile -------------------------------------------------------
    if B <= 8:
        block_b = B                                    # block dim == full dim is legal
    else:
        block_b = max(8, (min(int(block_b), B) // 8) * 8)
        # Keep >= 2 batch blocks when possible so the 'parallel' axis can be
        # sharded across both v7x TensorCores.
        while B >= 16 and pl.cdiv(B, block_b) < 2 and block_b > 8:
            block_b = max(8, ((block_b // 2) // 8) * 8)

    # ---- hid chunk --------------------------------------------------------
    tk = max(LANE, min(_round_up(int(block_hid), LANE), hid_p0))

    # ---- generation-aware VMEM budget --------------------------------------
    try:
        vmem_cap = int(pltpu.get_tpu_info().vmem_capacity_bytes)
    except Exception:
        vmem_cap = 64 << 20        # conservative fallback: v7x per-TensorCore VMEM
    vmem_cap = min(vmem_cap, 128 << 20)

    def _vmem_est(bb, tkk):
        return (2 * bb * inp * x_bytes          # x tile (double-buffered, stays in x dtype)
                + 2 * inp * tkk * w_bytes       # W1^T hid-chunk
                + 2 * tkk * 4                   # b1 chunk (f32)
                + 2 * tkk * out_p * w_bytes     # W2^T hid-chunk
                + 2 * out_p * 4                 # b2 (f32)
                + 2 * bb * out_p * out_bytes    # y tile (double-buffered)
                + bb * out_p * 4                # acc scratch (f32)
                + bb * tkk * (4 + w_bytes)      # h (f32) + h cast to bf16
                + bb * out_p * 4)               # second-dot result before +=

    budget = max(vmem_cap - (16 << 20), 24 << 20)
    while _vmem_est(block_b, tk) > budget and tk > LANE:
        tk = max(LANE, ((tk // 2) // LANE) * LANE)
    while _vmem_est(block_b, tk) > budget and block_b > 8:
        block_b = max(8, ((block_b // 2) // 8) * 8)

    # Equalize hid chunks: nk chunks of tk (multiple of 128) exactly covering
    # hid_p, so every k block is fully in-bounds (zero padding is inert).
    nk = pl.cdiv(hid_p0, tk)
    tk = pl.cdiv(hid_p0 // LANE, nk) * LANE
    hid_p = nk * tk

    vmem_limit = int(min(max(_vmem_est(block_b, tk) + (8 << 20), 32 << 20),
                         vmem_cap - (2 << 20)))

    # ---- weight / bias prep (small, one-time wrapper pass) -----------------
    w1_t = jnp.pad(w1.astype(compute_dtype).T, ((0, 0), (0, hid_p - hid)))   # (inp, hid_p)
    w2_t = jnp.pad(w2.astype(compute_dtype).T,
                   ((0, hid_p - hid), (0, out_p - out)))                     # (hid_p, out_p)
    b1_p = jnp.pad(b1.astype(jnp.float32), (0, hid_p - hid)).reshape(1, hid_p)
    b2_p = jnp.pad(b2.astype(jnp.float32), (0, out_p - out)).reshape(1, out_p)

    grid = (pl.cdiv(B, block_b), nk)   # batch parallel, hid reduction innermost

    in_specs = [
        pl.BlockSpec((block_b, inp), lambda i, k: (i, 0)),   # x: resident across k
        pl.BlockSpec((inp, tk),      lambda i, k: (0, k)),   # W1^T hid-chunk
        pl.BlockSpec((1, tk),        lambda i, k: (0, k)),   # b1 chunk
        pl.BlockSpec((tk, out_p),    lambda i, k: (k, 0)),   # W2^T hid-chunk
        pl.BlockSpec((1, out_p),     lambda i, k: (0, 0)),   # b2
    ]
    out_spec = pl.BlockSpec((block_b, out_p), lambda i, k: (i, 0))

    flops = 2 * B * (inp * hid + hid * out)
    bytes_accessed = (B * inp * x_bytes + inp * hid_p * w_bytes
                      + hid_p * out_p * w_bytes + (hid_p + out_p) * 4
                      + B * out_p * out_bytes)

    y_p = pl.pallas_call(
        _mlp_kernel,
        out_shape=jax.ShapeDtypeStruct((B, out_p), out_dtype),
        grid=grid,
        in_specs=in_specs,
        out_specs=out_spec,
        scratch_shapes=[pltpu.VMEM((block_b, out_p), jnp.float32)],
        compiler_params=pltpu.CompilerParams(
            dimension_semantics=("parallel", "arbitrary"),
            vmem_limit_bytes=vmem_limit,
        ),
        cost_estimate=pl.CostEstimate(flops=flops, transcendentals=0,
                                      bytes_accessed=bytes_accessed),
    )(x, w1_t, b1_p, w2_t, b2_p)

    return y_p if out_p == out else y_p[:, :out]


if __name__ == "__main__":
    # Small shapes consistent with the module: inp=32, hid=64, out=16, batch=8.
    B, INP, HID, OUT = 8, 32, 64, 16

    key = jax.random.PRNGKey(0)
    kx, kw1, kb1, kw2, kb2 = jax.random.split(key, 5)

    x = jax.random.normal(kx, (B, INP), dtype=jnp.float32)
    # PyTorch nn.Linear weight shapes: (hid, inp) and (out, hid).
    w1 = jax.random.normal(kw1, (HID, INP), dtype=jnp.float32) * 0.1
    b1 = jax.random.normal(kb1, (HID,), dtype=jnp.float32) * 0.1
    w2 = jax.random.normal(kw2, (OUT, HID), dtype=jnp.float32) * 0.1
    b2 = jax.random.normal(kb2, (OUT,), dtype=jnp.float32) * 0.1

    y = double_layer_mlp(x, w1, b1, w2, b2)
    y = jax.block_until_ready(y)
    assert y.shape == (B, OUT)

    # Reference 1: same mixed precision as the kernel (bf16 operands, f32 acc).
    xb, w1b, w2b = (a.astype(jnp.bfloat16) for a in (x, w1, w2))
    h_ref = jnp.maximum(
        jnp.dot(xb, w1b.T, preferred_element_type=jnp.float32) + b1, 0.0)
    y_ref = jnp.dot(h_ref.astype(jnp.bfloat16), w2b.T,
                    preferred_element_type=jnp.float32) + b2
    assert jnp.allclose(y, y_ref, atol=5e-3, rtol=5e-3), \
        float(jnp.max(jnp.abs(y - y_ref)))

    # Reference 2: full-f32 PyTorch-equivalent forward (looser tolerance due
    # to bf16 matmul operands).
    y_f32 = jnp.maximum(x @ w1.T + b1, 0.0) @ w2.T + b2
    assert jnp.allclose(y, y_f32, atol=5e-2, rtol=5e-2), \
        float(jnp.max(jnp.abs(y - y_f32)))

    print("KERNEL_OK")
</pallas_src>

<mosaic_0001>
module attributes {stable_mosaic.version = 11 : i64} {
  func.func @_mlp_kernel(%arg0: i32, %arg1: i32, %arg2: memref<8x32xf32, #tpu.memory_space<vmem>>, %arg3: memref<32x128xbf16, #tpu.memory_space<vmem>>, %arg4: memref<1x128xf32, #tpu.memory_space<vmem>>, %arg5: memref<128x128xbf16, #tpu.memory_space<vmem>>, %arg6: memref<1x128xf32, #tpu.memory_space<vmem>>, %arg7: memref<8x128xf32, #tpu.memory_space<vmem>>, %arg8: memref<8x128xf32, #tpu.memory_space<vmem>>) attributes {dimension_semantics = [#tpu.dimension_semantics<parallel>, #tpu.dimension_semantics<arbitrary>], iteration_bounds = array<i64: 1, 1>, scalar_prefetch = 0 : i64, scratch_operands = 1 : i64, tpu.core_type = #tpu.core_type<tc>, window_params = [{transform_indices = @transform_0, window_bounds = array<i64: 8, 32>}, {transform_indices = @transform_1, window_bounds = array<i64: 32, 128>}, {transform_indices = @transform_2, window_bounds = array<i64: 1, 128>}, {transform_indices = @transform_3, window_bounds = array<i64: 128, 128>}, {pipeline_mode = #tpu.pipeline_mode<synchronous>, transform_indices = @transform_4, window_bounds = array<i64: 1, 128>}, {transform_indices = @transform_5, window_bounds = array<i64: 8, 128>}]} {
    %c0_i32 = arith.constant 0 : i32
    %0 = arith.cmpi eq, %arg1, %c0_i32 : i32
    %1 = arith.extui %0 : i1 to i32
    %c0_i32_0 = arith.constant 0 : i32
    %2 = arith.cmpi ne, %1, %c0_i32_0 : i32
    scf.if %2 {
      %cst_16 = arith.constant 0.000000e+00 : f32
      %21 = vector.broadcast %cst_16 : f32 to vector<8x128xf32>
      %c0_17 = arith.constant 0 : index
      %c0_18 = arith.constant 0 : index
      %22 = vector.load %arg8[%c0_17, %c0_18] : memref<8x128xf32, #tpu.memory_space<vmem>>, vector<8x128xf32>
      tpu.vector_store %arg8[%c0_17, %c0_18], %21 {strides = array<i32>} : memref<8x128xf32, #tpu.memory_space<vmem>>, vector<8x128xf32>,
    } else {
    }
    %c0 = arith.constant 0 : index
    %c0_1 = arith.constant 0 : index
    %3 = vector.load %arg2[%c0, %c0_1] : memref<8x32xf32, #tpu.memory_space<vmem>>, vector<8x32xf32>
    %4 = arith.truncf %3 : vector<8x32xf32> to vector<8x32xbf16>
    %c0_2 = arith.constant 0 : index
    %c0_3 = arith.constant 0 : index
    %5 = vector.load %arg3[%c0_2, %c0_3] : memref<32x128xbf16, #tpu.memory_space<vmem>>, vector<32x128xbf16>
    %cst = arith.constant dense<0.000000e+00> : vector<8x128xf32>
    %6 = tpu.matmul %4, %5, %cst {dimension_numbers = #tpu.dot_dimension_numbers<[1], [0], [0], [1], [0, 0, 1, 1], [], []>} : vector<8x32xbf16>, vector<32x128xbf16>, vector<8x128xf32> -> vector<8x128xf32>
    %c0_4 = arith.constant 0 : index
    %c0_5 = arith.constant 0 : index
    %7 = vector.load %arg4[%c0_4, %c0_5] : memref<1x128xf32, #tpu.memory_space<vmem>>, vector<1x128xf32>
    %8 = vector.broadcast %7 : vector<1x128xf32> to vector<8x128xf32>
    %9 = arith.addf %6, %8 : vector<8x128xf32>
    %cst_6 = arith.constant 0.000000e+00 : f32
    %10 = vector.broadcast %cst_6 : f32 to vector<8x128xf32>
    %11 = arith.maximumf %9, %10 : vector<8x128xf32>
    %c0_7 = arith.constant 0 : index
    %c0_8 = arith.constant 0 : index
    %12 = vector.load %arg8[%c0_7, %c0_8] : memref<8x128xf32, #tpu.memory_space<vmem>>, vector<8x128xf32>
    %13 = arith.truncf %11 : vector<8x128xf32> to vector<8x128xbf16>
    %c0_9 = arith.constant 0 : index
    %c0_10 = arith.constant 0 : index
    %14 = vector.load %arg5[%c0_9, %c0_10] : memref<128x128xbf16, #tpu.memory_space<vmem>>, vector<128x128xbf16>
    %cst_11 = arith.constant dense<0.000000e+00> : vector<8x128xf32>
    %15 = tpu.matmul %13, %14, %cst_11 {dimension_numbers = #tpu.dot_dimension_numbers<[1], [0], [0], [1], [0, 0, 1, 1], [], []>} : vector<8x128xbf16>, vector<128x128xbf16>, vector<8x128xf32> -> vector<8x128xf32>
    %16 = arith.addf %12, %15 : vector<8x128xf32>
    %c0_12 = arith.constant 0 : index
    %c0_13 = arith.constant 0 : index
    %17 = vector.load %arg8[%c0_12, %c0_13] : memref<8x128xf32, #tpu.memory_space<vmem>>, vector<8x128xf32>
    tpu.vector_store %arg8[%c0_12, %c0_13], %16 {strides = array<i32>} : memref<8x128xf32, #tpu.memory_space<vmem>>, vector<8x128xf32>,
    %c0_i32_14 = arith.constant 0 : i32
    %18 = arith.cmpi eq, %arg1, %c0_i32_14 : i32
    %19 = arith.extui %18 : i1 to i32
    %c0_i32_15 = arith.constant 0 : i32
    %20 = arith.cmpi ne, %19, %c0_i32_15 : i32
    scf.if %20 {
      %c0_16 = arith.constant 0 : index
      %c0_17 = arith.constant 0 : index
      %21 = vector.load %arg8[%c0_16, %c0_17] : memref<8x128xf32, #tpu.memory_space<vmem>>, vector<8x128xf32>
      %c0_18 = arith.constant 0 : index
      %c0_19 = arith.constant 0 : index
      %22 = vector.load %arg6[%c0_18, %c0_19] : memref<1x128xf32, #tpu.memory_space<vmem>>, vector<1x128xf32>
      %23 = vector.broadcast %22 : vector<1x128xf32> to vector<8x128xf32>
      %24 = arith.addf %21, %23 : vector<8x128xf32>
      %c0_20 = arith.constant 0 : index
      %c0_21 = arith.constant 0 : index
      %25 = vector.load %arg7[%c0_20, %c0_21] : memref<8x128xf32, #tpu.memory_space<vmem>>, vector<8x128xf32>
      tpu.vector_store %arg7[%c0_20, %c0_21], %24 {strides = array<i32>} : memref<8x128xf32, #tpu.memory_space<vmem>>, vector<8x128xf32>,
    } else {
    }
    return
  }
  func.func @transform_0(%arg0: i32, %arg1: i32) -> (i32, i32) {
    %c0_i32 = arith.constant 0 : i32
    %c0_i32_0 = arith.constant 0 : i32
    return %arg0, %c0_i32 : i32, i32
  }
  func.func @transform_1(%arg0: i32, %arg1: i32) -> (i32, i32) {
    %c0_i32 = arith.constant 0 : i32
    %c0_i32_0 = arith.constant 0 : i32
    return %c0_i32, %arg1 : i32, i32
  }
  func.func @transform_2(%arg0: i32, %arg1: i32) -> (i32, i32) {
    %c0_i32 = arith.constant 0 : i32
    %c0_i32_0 = arith.constant 0 : i32
    return %c0_i32, %arg1 : i32, i32
  }
  func.func @transform_3(%arg0: i32, %arg1: i32) -> (i32, i32) {
    %c0_i32 = arith.constant 0 : i32
    %c0_i32_0 = arith.constant 0 : i32
    return %arg1, %c0_i32 : i32, i32
  }
  func.func @transform_4(%arg0: i32, %arg1: i32) -> (i32, i32) {
    %c0_i32 = arith.constant 0 : i32
    %c0_i32_0 = arith.constant 0 : i32
    %c0_i32_1 = arith.constant 0 : i32
    return %c0_i32, %c0_i32_0 : i32, i32
  }
  func.func @transform_5(%arg0: i32, %arg1: i32) -> (i32, i32) {
    %c0_i32 = arith.constant 0 : i32
    %c0_i32_0 = arith.constant 0 : i32
    return %arg0, %c0_i32 : i32, i32
  }
}

</mosaic_0001>

<llo_original>
// kernel: tpu_custom_call.1
$region0: #{tpu_custom_call.1}
  #allocation0 [shape = 'u32[]', space=smem, size = 0x4, offset = 0x4, fixed_abs, tag = 'smem constant byte address 0x4 - core index']
  #allocation1 [shape = 'u32[72,128]{1,0:T(1,128)}', space=vmem, size = 0x9000, scoped, tag = 'internal scratch']
  #allocation2 [shape = 'f32[8,128]{1,0:T(8,128)}', space=vmem, size = 0x1000, scoped, tag = 'scratch operand']
  %s0 = inlined_call_operand.hbm [shape: f32[8,32], index: 0, kind: input, shape index: {}]
  %s1 = inlined_call_operand.hbm [shape: bf16[32,128], index: 1, kind: input, shape index: {}]
  %s2 = inlined_call_operand.vmem [shape: f32[1,128], index: 2, kind: input, shape index: {}]
  %s3 = inlined_call_operand.hbm [shape: bf16[128,128], index: 3, kind: input, shape index: {}]
  %s4 = inlined_call_operand.vmem [shape: f32[1,128], index: 4, kind: input, shape index: {}]
  %s5 = inlined_call_operand.hbm [shape: f32[8,128], index: 5, kind: output, shape index: {}]
  %s6 = sld [smem:[#allocation0]]
  $region50: #{tpu_custom_call.1} parent=0
    _
  %s8 = ssub.s32 1, %s6
  %s9 = scalar_select 0, %s8, %s6
  $region1: #{tpu_custom_call.1} parent=0
    #allocation3 [shape = 'u8[4096]{0}', space=vmem, size = 0x1000, scoped, tag = 'input window, operand 0, single buffered']
    #allocation4 [shape = 's32[1]{0}', space=sflag, size = 0x4, scoped, tag = 'scoped memory for tpu_custom_call.1']
    #allocation5 [shape = 's32[1]{0}', space=sflag, size = 0x4, scoped, tag = 'scoped memory for tpu_custom_call.1']
    #allocation6 [shape = 'u8[8192]{0}', space=vmem, size = 0x2000, scoped, tag = 'input window, operand 1, single buffered']
    #allocation7 [shape = 's32[1]{0}', space=sflag, size = 0x4, scoped, tag = 'scoped memory for tpu_custom_call.1']
    #allocation8 [shape = 'u8[32768]{0}', space=vmem, size = 0x8000, scoped, tag = 'input window, operand 3, single buffered']
    #allocation9 [shape = 'u8[4096]{0}', space=vmem, size = 0x1000, scoped, tag = 'output window, operand 0, single buffered']
    %10 = vsyncpa [#allocation4], 0
    %11 = vsyncpa [#allocation7], 0
    %12 = vsyncpa [#allocation5], 0
    // Predicated region
    $region2: #{tpu_custom_call.1} parent=1 // pred_check
      _
    $region3: #{tpu_custom_call.1} parent=1 // pred_check_branch
      %14 = sbr.rel (0) target = $region5
    $region4: #{tpu_custom_call.1} parent=1 // pred_region
      %16 = vsyncadd [#allocation4], 0
      %s18 = sshll.u32 %s0, 4
      %s19 = int_to_ptr.hbm [resolvable:$true] %s18
      %s20 = sshll.u32 [#allocation3], 4
      %s21 = int_to_ptr.vmem [resolvable:$true] %s20
      %23 = dma.hbm_to_vmem [thread:$0]  %s19, 128, %s21, [#allocation4]
    $region5: #{tpu_custom_call.1} parent=1 // pred_fallthru
      _
    // Predicated region
    $region6: #{tpu_custom_call.1} parent=1 // pred_check
      _
    $region7: #{tpu_custom_call.1} parent=1 // pred_check_branch
      %25 = sbr.rel (0) target = $region9
    $region8: #{tpu_custom_call.1} parent=1 // pred_region
      %27 = vsyncadd [#allocation7], 0
      %s28 = sshll.u32 %s1, 4
      %s29 = int_to_ptr.hbm [resolvable:$true] %s28
      %s30 = sshll.u32 [#allocation6], 4
      %s31 = int_to_ptr.vmem [resolvable:$true] %s30
      %36 = dma.hbm_to_vmem [thread:$0]  %s29, 256, %s31, [#allocation7], 64, 64, 4
    $region9: #{tpu_custom_call.1} parent=1 // pred_fallthru
      _
    // Predicated region
    $region10: #{tpu_custom_call.1} parent=1 // pred_check
      _
    $region11: #{tpu_custom_call.1} parent=1 // pred_check_branch
      %38 = sbr.rel (0) target = $region13
    $region12: #{tpu_custom_call.1} parent=1 // pred_region
      _
    $region13: #{tpu_custom_call.1} parent=1 // pred_fallthru
      _
    // Predicated region
    $region14: #{tpu_custom_call.1} parent=1 // pred_check
      _
    $region15: #{tpu_custom_call.1} parent=1 // pred_check_branch
      %40 = sbr.rel (0) target = $region17
    $region16: #{tpu_custom_call.1} parent=1 // pred_region
      %42 = vsyncadd [#allocation7], 0
      %s43 = sshll.u32 %s3, 4
      %s44 = int_to_ptr.hbm [resolvable:$true] %s43
      %s45 = sshll.u32 [#allocation8], 4
      %s46 = int_to_ptr.vmem [resolvable:$true] %s45
      %51 = dma.hbm_to_vmem [thread:$0]  %s44, 1024, %s46, [#allocation7], 64, 64, 4
    $region17: #{tpu_custom_call.1} parent=1 // pred_fallthru
      _
    // Predicated region
    $region18: #{tpu_custom_call.1} parent=1 // pred_check
      _
    $region19: #{tpu_custom_call.1} parent=1 // pred_check_branch
      %53 = sbr.rel (0) target = $region21
    $region20: #{tpu_custom_call.1} parent=1 // pred_region
      _
    $region21: #{tpu_custom_call.1} parent=1 // pred_fallthru
      _
    // Predicated region
    $region22: #{tpu_custom_call.1} parent=1 // pred_check
      _
    $region23: #{tpu_custom_call.1} parent=1 // pred_check_branch
      %55 = sbr.rel (0) target = $region25
    $region24: #{tpu_custom_call.1} parent=1 // pred_region
      %57 = dma.done [#allocation4], 128
    $region25: #{tpu_custom_call.1} parent=1 // pred_fallthru
      _
    // Predicated region
    $region26: #{tpu_custom_call.1} parent=1 // pred_check
      _
    $region27: #{tpu_custom_call.1} parent=1 // pred_check_branch
      %59 = sbr.rel (0) target = $region29
    $region28: #{tpu_custom_call.1} parent=1 // pred_region
      %61 = dma.done [#allocation7], 256
    $region29: #{tpu_custom_call.1} parent=1 // pred_fallthru
      _
    // Predicated region
    $region30: #{tpu_custom_call.1} parent=1 // pred_check
      _
    $region31: #{tpu_custom_call.1} parent=1 // pred_check_branch
      %63 = sbr.rel (0) target = $region33
    $region32: #{tpu_custom_call.1} parent=1 // pred_region
      %65 = dma.done [#allocation7], 1024
    $region33: #{tpu_custom_call.1} parent=1 // pred_fallthru
      _
    %p67 = scmp.eq.s32.totalorder 0, 0
    // Predicated region
    $region34: #{tpu_custom_call.1} parent=1 // pred_check
      %p68 = pneg %p67
    $region35: #{tpu_custom_call.1} parent=1 // pred_check_branch
      %70 = sbr.rel (%p68) target = $region37
    $region36: #{tpu_custom_call.1} parent=1 // pred_region
      %71 = vst [vmem:[#allocation2] sm:$0xff] 0.0
    $region37: #{tpu_custom_call.1} parent=1 // pred_fallthru
      _
    %v72 = vld [vmem:[#allocation3] sm:$0xff]
    %v73 = vpack.c.bf16 %v72, %v72
    %v74 = vld [vmem:[#allocation6] sm:$0xf]
    %v75 = vld [vmem:[#allocation6 + $0x4] sm:$0xf]
    %v76 = vld [vmem:[#allocation6 + $0x8] sm:$0xf]
    %v77 = vld [vmem:[#allocation6 + $0xc] sm:$0xf]
    %v78 = vld [vmem:[%s2] sm:$0x1]
    %v80 = vperm.slane %v78, 0
    %v86 = vunpack.c.l.b16 %v74
    %v87 = vunpack.c.l.b16 %v75
    %v88 = vunpack.c.l.b16 %v76
    %v89 = vunpack.c.l.b16 %v77
    %v90 = vpack.c.b16 %v87, %v86
    %v91 = vpack.c.b16 %v89, %v88
    %vm94 = vcmask 261120
    %v96 = vsel %vm94, %v73, 0
    %98 = vmatpush.bf16.msra.mxu0 0
    %99 = vmatpush.bf16.msra.mxu0 0
    %100 = vmatpush.bf16.msra.mxu0 0
    %101 = vmatpush.bf16.msra.mxu0 0
    %102 = vmatpush.bf16.msra.mxu0 0
    %103 = vmatpush.bf16.msra.mxu0 0
    %104 = vmatpush.bf16.msra.mxu0 %v91
    %105 = vmatpush.bf16.msra.mxu0 %v90
    %106 = vmatmul.bf16.gmra.mxu0 %v96
    %v107 = vpop.f32.mrf.mxu0
    %v108 = vadd.f32 %v80, %v107
    %v109 = vpop.f32.mrf.mxu0
    %110 = vdwg.mxu0
    %v111 = vmax.f32 %v108, 0.0
    %v112 = vld [vmem:[#allocation2] sm:$0xff]
    %v113 = vpack.c.bf16 %v111, %v111
    %v114 = vld [vmem:[#allocation8] sm:$0xf]
    %v115 = vld [vmem:[#allocation8 + $0x4] sm:$0xf]
    %v116 = vld [vmem:[#allocation8 + $0x8] sm:$0xf]
    %v117 = vld [vmem:[#allocation8 + $0xc] sm:$0xf]
    %v118 = vld [vmem:[#allocation8 + $0x10] sm:$0xf]
    %v119 = vld [vmem:[#allocation8 + $0x14] sm:$0xf]
    %v120 = vld [vmem:[#allocation8 + $0x18] sm:$0xf]
    %v121 = vld [vmem:[#allocation8 + $0x1c] sm:$0xf]
    %v122 = vld [vmem:[#allocation8 + $0x20] sm:$0xf]
    %v123 = vld [vmem:[#allocation8 + $0x24] sm:$0xf]
    %v124 = vld [vmem:[#allocation8 + $0x28] sm:$0xf]
    %v125 = vld [vmem:[#allocation8 + $0x2c] sm:$0xf]
    %v126 = vld [vmem:[#allocation8 + $0x30] sm:$0xf]
    %v127 = vld [vmem:[#allocation8 + $0x34] sm:$0xf]
    %v128 = vld [vmem:[#allocation8 + $0x38] sm:$0xf]
    %v129 = vld [vmem:[#allocation8 + $0x3c] sm:$0xf]
    %v146 = vunpack.c.l.b16 %v114
    %v147 = vunpack.c.l.b16 %v115
    %v148 = vunpack.c.l.b16 %v116
    %v149 = vunpack.c.l.b16 %v117
    %v150 = vunpack.c.l.b16 %v118
    %v151 = vunpack.c.l.b16 %v119
    %v152 = vunpack.c.l.b16 %v120
    %v153 = vunpack.c.l.b16 %v121
    %v154 = vunpack.c.l.b16 %v122
    %v155 = vunpack.c.l.b16 %v123
    %v156 = vunpack.c.l.b16 %v124
    %v157 = vunpack.c.l.b16 %v125
    %v158 = vunpack.c.l.b16 %v126
    %v159 = vunpack.c.l.b16 %v127
    %v160 = vunpack.c.l.b16 %v128
    %v161 = vunpack.c.l.b16 %v129
    %v162 = vpack.c.b16 %v147, %v146
    %v163 = vpack.c.b16 %v149, %v148
    %v164 = vpack.c.b16 %v151, %v150
    %v165 = vpack.c.b16 %v153, %v152
    %v166 = vpack.c.b16 %v155, %v154
    %v167 = vpack.c.b16 %v157, %v156
    %v168 = vpack.c.b16 %v159, %v158
    %v169 = vpack.c.b16 %v161, %v160
    %178 = vmatpush.bf16.msra.mxu0 %v169
    %179 = vmatpush.bf16.msra.mxu0 %v168
    %180 = vmatpush.bf16.msra.mxu0 %v167
    %181 = vmatpush.bf16.msra.mxu0 %v166
    %182 = vmatpush.bf16.msra.mxu0 %v165
    %183 = vmatpush.bf16.msra.mxu0 %v164
    %184 = vmatpush.bf16.msra.mxu0 %v163
    %185 = vmatpush.bf16.msra.mxu0 %v162
    %186 = vmatmul.bf16.gmra.mxu0 %v113
    %v187 = vpop.f32.mrf.mxu0
    %v188 = vadd.f32 0.0, %v187
    %v189 = vpop.f32.mrf.mxu0
    %190 = vdwg.mxu0
    %v191 = vadd.f32 %v112, %v188
    %192 = vst [vmem:[#allocation2] sm:$0xff] %v191
    // Predicated region
    $region38: #{tpu_custom_call.1} parent=1 // pred_check
      %p193 = pneg %p67
    $region39: #{tpu_custom_call.1} parent=1 // pred_check_branch
      %195 = sbr.rel (%p193) target = $region41
    $region40: #{tpu_custom_call.1} parent=1 // pred_region
      %v196 = vld [vmem:[#allocation2] sm:$0xff]
      %v197 = vld [vmem:[%s4] sm:$0x1]
      %v199 = vperm.slane %v197, 0
      %v201 = vadd.f32 %v196, %v199
      %202 = vst [vmem:[#allocation9] sm:$0xff] %v201
    $region41: #{tpu_custom_call.1} parent=1 // pred_fallthru
      _
    // Predicated region
    $region42: #{tpu_custom_call.1} parent=1 // pred_check
      _
    $region43: #{tpu_custom_call.1} parent=1 // pred_check_branch
      %204 = sbr.rel (0) target = $region45
    $region44: #{tpu_custom_call.1} parent=1 // pred_region
      %206 = vsyncadd [#allocation5], 0
      %s208 = sshll.u32 [#allocation9], 4
      %s209 = int_to_ptr.vmem [resolvable:$true] %s208
      %s210 = sshll.u32 %s5, 4
      %s211 = int_to_ptr.hbm [resolvable:$true] %s210
      %213 = dma.vmem_to_hbm [thread:$0]  %s209, 128, %s211, [#allocation5]
    $region45: #{tpu_custom_call.1} parent=1 // pred_fallthru
      _
    // Predicated region
    $region46: #{tpu_custom_call.1} parent=1 // pred_check
      _
    $region47: #{tpu_custom_call.1} parent=1 // pred_check_branch
      %215 = sbr.rel (0) target = $region49
    $region48: #{tpu_custom_call.1} parent=1 // pred_region
      %217 = dma.done [#allocation5], 128
    $region49: #{tpu_custom_call.1} parent=1 // pred_fallthru
      _
    %218 = vsyncpa [#allocation4], 1
    %219 = vsyncpa [#allocation7], 1
    %220 = vsyncpa [#allocation5], 1

</llo_original>
